<compile_context>
chip_gen: v6e
topology: v6e:2x2x1
jax: 0.10.0
libtpu: 0.0.40
codegen_flags: <defaults>
</compile_context>

<pallas_src>
import functools

import jax
import jax.numpy as jnp
from jax import lax
from jax.experimental import pallas as pl
from jax.experimental.pallas import tpu as pltpu


def _cbn_kernel(gamma_ref, beta_ref, x_ref, o_ref, *, eps, inv_count):
    # gamma_ref / beta_ref: (N, C_TILE, 1) f32 (VMEM) -- per-sample conditional affine
    # x_ref / o_ref:        (N, C_TILE, HW) f32 (VMEM), HW lane-dense
    x = x_ref[...]                                            # (N, CT, HW)

    # --- per-channel mean: lane reduce per (n, c) row, then combine samples.
    row_sum = jnp.sum(x, axis=2, keepdims=True)               # (N, CT, 1)
    ch_sum = jnp.sum(row_sum, axis=0, keepdims=True)          # (1, CT, 1)
    mean = ch_sum * inv_count                                 # (1, CT, 1)

    # --- biased variance from the centered tensor (xc is transient: the
    #     output pass below uses x directly, so only one (N,CT,HW) slab
    #     needs to stay live).
    xc = x - mean                                             # (N, CT, HW)
    row_sq = jnp.sum(xc * xc, axis=2, keepdims=True)          # (N, CT, 1)
    ch_sq = jnp.sum(row_sq, axis=0, keepdims=True)            # (1, CT, 1)
    inv_std = lax.rsqrt(ch_sq * inv_count + eps)              # (1, CT, 1)

    # --- folded conditional affine: out = x * scale + shift
    scale = gamma_ref[...] * inv_std                          # (N, CT, 1)
    shift = beta_ref[...] - mean * scale                      # (N, CT, 1)
    o_ref[...] = x * scale + shift


def _vmem_budget_bytes():
    # Generation-aware VMEM budget (v7x: 64 MiB physical, v5e/v6e: 128 MiB).
    try:
        cap = pltpu.get_tpu_info().vmem_capacity_bytes
    except Exception:
        cap = 64 * 1024 * 1024
    return int(cap * 0.75)


def _pick_c_tile(N, C, HW, itemsize, vmem_budget):
    """Largest channel tile whose double-buffered in+out blocks fit the budget."""
    def fits(ct):
        # 2 buffers x (input + output) x block bytes, plus ~1 MiB slack for
        # gamma/beta/stat columns.
        return 2 * 2 * N * ct * HW * itemsize + (1 << 20) <= vmem_budget

    if C % 8 != 0 or C <= 8:
        # Tile must be a multiple of 8 or equal the full extent; small / odd C
        # uses a single full-channel block.
        return C
    best = 8
    ct = 8
    while ct <= C:
        if C % ct == 0 and fits(ct):
            best = ct
        ct += 8
    return best


def conditional_batchnorm2d(x, y, embed_weight, *, eps=1e-5):
    """x: (N, C, H, W) f32, y: (N,) int labels, embed_weight: (K, 2C) f32.
    Returns (N, C, H, W) f32 (training-mode BN + conditional affine)."""
    N, C, H, W = x.shape
    HW = H * W
    K, twoC = embed_weight.shape
    assert twoC == 2 * C

    # Wrapper-side embedding gather (negligible HBM traffic: N * 2C * 4 B).
    y = jnp.clip(y.astype(jnp.int32), 0, K - 1)               # guard OOB labels
    emb = embed_weight[y]                                      # (N, 2C)
    gamma = emb[:, :C].reshape(N, C, 1)
    beta = emb[:, C:].reshape(N, C, 1)

    # Free, contiguous view: (N, C, H, W) -> (N, C, HW); HW on the lane axis.
    x3 = x.reshape(N, C, HW)

    itemsize = jnp.dtype(x.dtype).itemsize
    vmem_budget = _vmem_budget_bytes()
    c_tile = _pick_c_tile(N, C, HW, itemsize, vmem_budget)
    grid = (C // c_tile,)

    cost = pl.CostEstimate(
        flops=6 * N * C * HW,
        transcendentals=C,
        bytes_accessed=2 * N * C * HW * itemsize + 2 * N * C * itemsize,
    )

    kernel = functools.partial(_cbn_kernel, eps=eps, inv_count=1.0 / float(N * HW))
    out = pl.pallas_call(
        kernel,
        out_shape=jax.ShapeDtypeStruct((N, C, HW), x.dtype),
        grid=grid,
        in_specs=[
            pl.BlockSpec((N, c_tile, 1), lambda i: (0, i, 0)),    # gamma
            pl.BlockSpec((N, c_tile, 1), lambda i: (0, i, 0)),    # beta
            pl.BlockSpec((N, c_tile, HW), lambda i: (0, i, 0)),   # x
        ],
        out_specs=pl.BlockSpec((N, c_tile, HW), lambda i: (0, i, 0)),
        compiler_params=pltpu.CompilerParams(
            dimension_semantics=("parallel",),   # channel tiles are independent
            vmem_limit_bytes=vmem_budget,
        ),
        cost_estimate=cost,
    )(gamma, beta, x3)

    return out.reshape(N, C, H, W)


def _reference(x, y, embed_weight, eps=1e-5):
    # Pure-JAX reference of the PyTorch forward (training-mode BN).
    N, C, H, W = x.shape
    mean = jnp.mean(x, axis=(0, 2, 3), keepdims=True)
    var = jnp.mean(jnp.square(x - mean), axis=(0, 2, 3), keepdims=True)
    x_hat = (x - mean) / jnp.sqrt(var + eps)
    emb = embed_weight[y]
    gamma = emb[:, :C].reshape(N, C, 1, 1)
    beta = emb[:, C:].reshape(N, C, 1, 1)
    return gamma * x_hat + beta


if __name__ == "__main__":
    num_features = 4      # C
    num_classes = 10
    N, H, W = 2, 16, 16

    key = jax.random.PRNGKey(0)
    kx, ky, kw = jax.random.split(key, 3)

    # Input feature map and class labels.
    x = jax.random.normal(kx, (N, num_features, H, W), dtype=jnp.float32)
    y = jax.random.randint(ky, (N,), 0, num_classes, dtype=jnp.int32)

    # Deterministic embedding init mimicking the PyTorch module:
    #   weight[:, :C] ~ Normal(1, 0.02), weight[:, C:] = 0
    gamma_part = 1.0 + 0.02 * jax.random.normal(
        kw, (num_classes, num_features), dtype=jnp.float32)
    beta_part = jnp.zeros((num_classes, num_features), dtype=jnp.float32)
    embed_weight = jnp.concatenate([gamma_part, beta_part], axis=1)

    fn = jax.jit(conditional_batchnorm2d)
    out = fn(x, y, embed_weight)
    out = jax.block_until_ready(out)

    ref = _reference(x, y, embed_weight)
    assert out.shape == (N, num_features, H, W)
    assert jnp.allclose(out, ref, atol=1e-5, rtol=1e-5), "mismatch vs reference"

    print("KERNEL_OK")
</pallas_src>

<mosaic_0001>
module attributes {stable_mosaic.version = 11 : i64} {
  func.func @_cbn_kernel(%arg0: i32, %arg1: memref<2x4x1xf32, #tpu.memory_space<vmem>>, %arg2: memref<2x4x1xf32, #tpu.memory_space<vmem>>, %arg3: memref<2x4x256xf32, #tpu.memory_space<vmem>>, %arg4: memref<2x4x256xf32, #tpu.memory_space<vmem>>) attributes {dimension_semantics = [#tpu.dimension_semantics<parallel>], iteration_bounds = array<i64: 1>, scalar_prefetch = 0 : i64, scratch_operands = 0 : i64, tpu.core_type = #tpu.core_type<tc>, window_params = [{transform_indices = @transform_0, window_bounds = array<i64: 2, 4, 1>}, {transform_indices = @transform_1, window_bounds = array<i64: 2, 4, 1>}, {transform_indices = @transform_2, window_bounds = array<i64: 2, 4, 256>}, {transform_indices = @transform_3, window_bounds = array<i64: 2, 4, 256>}]} {
    %c0 = arith.constant 0 : index
    %c0_0 = arith.constant 0 : index
    %c0_1 = arith.constant 0 : index
    %0 = vector.load %arg3[%c0, %c0_0, %c0_1] : memref<2x4x256xf32, #tpu.memory_space<vmem>>, vector<2x4x256xf32>
    %cst = arith.constant dense<0.000000e+00> : vector<2x4xf32>
    %1 = vector.multi_reduction <add>, %0, %cst [2] : vector<2x4x256xf32> to vector<2x4xf32>
    %2 = vector.shape_cast %1 : vector<2x4xf32> to vector<2x4x1xf32>
    %cst_2 = arith.constant dense<0.000000e+00> : vector<4x1xf32>
    %3 = vector.multi_reduction <add>, %2, %cst_2 [0] : vector<2x4x1xf32> to vector<4x1xf32>
    %4 = vector.shape_cast %3 : vector<4x1xf32> to vector<1x4x1xf32>
    %cst_3 = arith.constant 0.001953125 : f32
    %5 = vector.broadcast %cst_3 : f32 to vector<1x4x1xf32>
    %6 = arith.mulf %4, %5 : vector<1x4x1xf32>
    %7 = vector.broadcast %6 : vector<1x4x1xf32> to vector<2x4x256xf32>
    %8 = arith.subf %0, %7 : vector<2x4x256xf32>
    %9 = arith.mulf %8, %8 : vector<2x4x256xf32>
    %cst_4 = arith.constant dense<0.000000e+00> : vector<2x4xf32>
    %10 = vector.multi_reduction <add>, %9, %cst_4 [2] : vector<2x4x256xf32> to vector<2x4xf32>
    %11 = vector.shape_cast %10 : vector<2x4xf32> to vector<2x4x1xf32>
    %cst_5 = arith.constant dense<0.000000e+00> : vector<4x1xf32>
    %12 = vector.multi_reduction <add>, %11, %cst_5 [0] : vector<2x4x1xf32> to vector<4x1xf32>
    %13 = vector.shape_cast %12 : vector<4x1xf32> to vector<1x4x1xf32>
    %cst_6 = arith.constant 0.001953125 : f32
    %14 = vector.broadcast %cst_6 : f32 to vector<1x4x1xf32>
    %15 = arith.mulf %13, %14 : vector<1x4x1xf32>
    %cst_7 = arith.constant 9.99999974E-6 : f32
    %16 = vector.broadcast %cst_7 : f32 to vector<1x4x1xf32>
    %17 = arith.addf %15, %16 : vector<1x4x1xf32>
    %18 = math.rsqrt %17 : vector<1x4x1xf32>
    %c0_8 = arith.constant 0 : index
    %c0_9 = arith.constant 0 : index
    %c0_10 = arith.constant 0 : index
    %19 = vector.load %arg1[%c0_8, %c0_9, %c0_10] : memref<2x4x1xf32, #tpu.memory_space<vmem>>, vector<2x4x1xf32>
    %20 = vector.broadcast %18 : vector<1x4x1xf32> to vector<2x4x1xf32>
    %21 = arith.mulf %19, %20 : vector<2x4x1xf32>
    %c0_11 = arith.constant 0 : index
    %c0_12 = arith.constant 0 : index
    %c0_13 = arith.constant 0 : index
    %22 = vector.load %arg2[%c0_11, %c0_12, %c0_13] : memref<2x4x1xf32, #tpu.memory_space<vmem>>, vector<2x4x1xf32>
    %23 = vector.broadcast %6 : vector<1x4x1xf32> to vector<2x4x1xf32>
    %24 = arith.mulf %23, %21 : vector<2x4x1xf32>
    %25 = arith.subf %22, %24 : vector<2x4x1xf32>
    %26 = vector.broadcast %21 : vector<2x4x1xf32> to vector<2x4x256xf32>
    %27 = arith.mulf %0, %26 : vector<2x4x256xf32>
    %28 = vector.broadcast %25 : vector<2x4x1xf32> to vector<2x4x256xf32>
    %29 = arith.addf %27, %28 : vector<2x4x256xf32>
    %c0_14 = arith.constant 0 : index
    %c0_15 = arith.constant 0 : index
    %c0_16 = arith.constant 0 : index
    %30 = vector.load %arg4[%c0_14, %c0_15, %c0_16] : memref<2x4x256xf32, #tpu.memory_space<vmem>>, vector<2x4x256xf32>
    tpu.vector_store %arg4[%c0_14, %c0_15, %c0_16], %29 {strides = array<i32>} : memref<2x4x256xf32, #tpu.memory_space<vmem>>, vector<2x4x256xf32>,
    return
  }
  func.func @transform_0(%arg0: i32) -> (i32, i32, i32) {
    %c0_i32 = arith.constant 0 : i32
    %c0_i32_0 = arith.constant 0 : i32
    %c0_i32_1 = arith.constant 0 : i32
    return %c0_i32, %arg0, %c0_i32_0 : i32, i32, i32
  }
  func.func @transform_1(%arg0: i32) -> (i32, i32, i32) {
    %c0_i32 = arith.constant 0 : i32
    %c0_i32_0 = arith.constant 0 : i32
    %c0_i32_1 = arith.constant 0 : i32
    return %c0_i32, %arg0, %c0_i32_0 : i32, i32, i32
  }
  func.func @transform_2(%arg0: i32) -> (i32, i32, i32) {
    %c0_i32 = arith.constant 0 : i32
    %c0_i32_0 = arith.constant 0 : i32
    %c0_i32_1 = arith.constant 0 : i32
    return %c0_i32, %arg0, %c0_i32_0 : i32, i32, i32
  }
  func.func @transform_3(%arg0: i32) -> (i32, i32, i32) {
    %c0_i32 = arith.constant 0 : i32
    %c0_i32_0 = arith.constant 0 : i32
    %c0_i32_1 = arith.constant 0 : i32
    return %c0_i32, %arg0, %c0_i32_0 : i32, i32, i32
  }
}

</mosaic_0001>

<llo_original>
// kernel: conditional_batchnorm2d.1
$region0: #{conditional_batchnorm2d.1}
  #allocation0 [shape = 'u32[]', space=smem, size = 0x4, offset = 0x4, fixed_abs, tag = 'smem constant byte address 0x4 - core index']
  #allocation1 [shape = 'u32[144,128]{1,0:T(1,128)}', space=vmem, size = 0x12000, scoped, tag = 'internal scratch']
  %s0 = inlined_call_operand.vmem [shape: f32[2,4,1], index: 0, kind: input, shape index: {}]
  %s1 = inlined_call_operand.vmem [shape: f32[2,4,1], index: 1, kind: input, shape index: {}]
  %s2 = inlined_call_operand.vmem [shape: f32[2,4,256], index: 2, kind: input, shape index: {}]
  %s3 = inlined_call_operand.vmem [shape: f32[2,4,256], index: 3, kind: output, shape index: {}]
  %s4 = sld [smem:[#allocation0]]
  $region22: #{conditional_batchnorm2d.1} parent=0
    _
  %s6 = ssub.s32 1, %s4
  %s7 = scalar_select 0, %s6, %s4
  // Predicated region
  $region2: #{conditional_batchnorm2d.1} parent=0 // pred_check
    _
  $region3: #{conditional_batchnorm2d.1} parent=0 // pred_check_branch
    %9 = sbr.rel (0) target = $region5
  $region4: #{conditional_batchnorm2d.1} parent=0 // pred_region
    _
  $region5: #{conditional_batchnorm2d.1} parent=0 // pred_fallthru
    _
  // Predicated region
  $region6: #{conditional_batchnorm2d.1} parent=0 // pred_check
    _
  $region7: #{conditional_batchnorm2d.1} parent=0 // pred_check_branch
    %11 = sbr.rel (0) target = $region9
  $region8: #{conditional_batchnorm2d.1} parent=0 // pred_region
    _
  $region9: #{conditional_batchnorm2d.1} parent=0 // pred_fallthru
    _
  // Predicated region
  $region10: #{conditional_batchnorm2d.1} parent=0 // pred_check
    _
  $region11: #{conditional_batchnorm2d.1} parent=0 // pred_check_branch
    %13 = sbr.rel (0) target = $region13
  $region12: #{conditional_batchnorm2d.1} parent=0 // pred_region
    _
  $region13: #{conditional_batchnorm2d.1} parent=0 // pred_fallthru
    _
  %v14 = vld [vmem:[%s2] sm:$0xff]
  %v15 = vld [vmem:[%s2 + $0x8] sm:$0xff]
  %v18 = vcombine.high %v14, %v14
  %v19 = vcombine.high %v15, %v15
  %vm22 = vcmask 1043456
  %v23 = vsel %vm22, %v14, 0.0
  %v24 = vsel %vm22, %v18, 0.0
  %v25 = vadd.f32 %v23, %v24
  %26 = vadd.xlane.f32.xlu0 %v25
  %v27 = vpop.xlane.xlu0 %26
  %v28 = vsel %vm22, %v15, 0.0
  %v29 = vsel %vm22, %v19, 0.0
  %v30 = vadd.f32 %v28, %v29
  %31 = vadd.xlane.f32.xlu0 %v30
  %v32 = vpop.xlane.xlu0 %31
  %v33 = vsel %vm22, %v27, 0.0
  %v34 = vsel %vm22, %v32, 0.0
  %v35 = vadd.f32 %v33, %v34
  %v36 = vmul.f32 %v35, 0.001953125
  %v39 = vunpack.c.l.s4 839922192
  %v40 = vunpack.c.0.s8 %v39
  %v41 = vlaneseq
  %v42 = vshrl.u32 %v41, 7
  %v43 = vsub.s32 %v40, %v42
  %v44 = vrot.slane %v36, %v43
  %v46 = vsub.f32 %v14, %v44
  %v47 = vsub.f32 %v15, %v44
  %v48 = vmul.f32 %v46, %v46
  %v49 = vmul.f32 %v47, %v47
  %v52 = vcombine.high %v48, %v48
  %v53 = vcombine.high %v49, %v49
  %v56 = vsel %vm22, %v48, 0.0
  %v57 = vsel %vm22, %v52, 0.0
  %v58 = vadd.f32 %v56, %v57
  %59 = vadd.xlane.f32.xlu0 %v58
  %v60 = vpop.xlane.xlu0 %59
  %v61 = vsel %vm22, %v49, 0.0
  %v62 = vsel %vm22, %v53, 0.0
  %v63 = vadd.f32 %v61, %v62
  %64 = vadd.xlane.f32.xlu0 %v63
  %v65 = vpop.xlane.xlu0 %64
  %v66 = vsel %vm22, %v60, 0.0
  %v67 = vsel %vm22, %v65, 0.0
  %v68 = vadd.f32 %v66, %v67
  %v69 = vmul.f32 %v68, 0.001953125
  %v70 = vadd.f32 %v69, 1e-05
  %v71 = vrsqrt.pop %v70
  %v72 = vld [vmem:[%s0] sm:$0xf]
  %v73 = vld [vmem:[%s0 + $0x4] sm:$0xf]
  %v74 = vmul.f32 %v72, %v71
  %v75 = vmul.f32 %v73, %v71
  %v76 = vld [vmem:[%s1] sm:$0xf]
  %v77 = vld [vmem:[%s1 + $0x4] sm:$0xf]
  %v78 = vmul.f32 %v36, %v74
  %v79 = vmul.f32 %v36, %v75
  %v80 = vsub.f32 %v76, %v78
  %v81 = vsub.f32 %v77, %v79
  %83 = vset.pattern.permute.xlu0 0
  %84 = vperm.xlu0 %83, %v74
  %v85 = vpop.permute.xlu0 %84
  %87 = vset.pattern.permute.xlu0 0
  %88 = vperm.xlu0 %87, %v75
  %v89 = vpop.permute.xlu0 %88
  %v91 = vunpack.c.l.s4 839922192
  %v92 = vunpack.c.0.s8 %v91
  %v93 = vlaneseq
  %v94 = vshrl.u32 %v93, 7
  %v95 = vsub.s32 %v92, %v94
  %v96 = vrot.slane %v85, %v95
  %v98 = vunpack.c.l.s4 839922192
  %v99 = vunpack.c.0.s8 %v98
  %v100 = vlaneseq
  %v101 = vshrl.u32 %v100, 7
  %v102 = vsub.s32 %v99, %v101
  %v103 = vrot.slane %v89, %v102
  %v106 = vmul.f32 %v14, %v96
  %v107 = vmul.f32 %v15, %v103
  %109 = vset.pattern.permute.xlu0 0
  %110 = vperm.xlu0 %109, %v80
  %v111 = vpop.permute.xlu0 %110
  %113 = vset.pattern.permute.xlu0 0
  %114 = vperm.xlu0 %113, %v81
  %v115 = vpop.permute.xlu0 %114
  %v117 = vunpack.c.l.s4 839922192
  %v118 = vunpack.c.0.s8 %v117
  %v119 = vlaneseq
  %v120 = vshrl.u32 %v119, 7
  %v121 = vsub.s32 %v118, %v120
  %v122 = vrot.slane %v111, %v121
  %v124 = vunpack.c.l.s4 839922192
  %v125 = vunpack.c.0.s8 %v124
  %v126 = vlaneseq
  %v127 = vshrl.u32 %v126, 7
  %v128 = vsub.s32 %v125, %v127
  %v129 = vrot.slane %v115, %v128
  %v132 = vadd.f32 %v106, %v122
  %v133 = vadd.f32 %v107, %v129
  %134 = vst [vmem:[%s3] sm:$0xff] %v132
  %135 = vst [vmem:[%s3 + $0x8] sm:$0xff] %v133
  // Predicated region
  $region14: #{conditional_batchnorm2d.1} parent=0 // pred_check
    _
  $region15: #{conditional_batchnorm2d.1} parent=0 // pred_check_branch
    %137 = sbr.rel (0) target = $region17
  $region16: #{conditional_batchnorm2d.1} parent=0 // pred_region
    _
  $region17: #{conditional_batchnorm2d.1} parent=0 // pred_fallthru
    _
  // Predicated region
  $region18: #{conditional_batchnorm2d.1} parent=0 // pred_check
    _
  $region19: #{conditional_batchnorm2d.1} parent=0 // pred_check_branch
    %139 = sbr.rel (0) target = $region21
  $region20: #{conditional_batchnorm2d.1} parent=0 // pred_region
    _
  $region21: #{conditional_batchnorm2d.1} parent=0 // pred_fallthru
    _

</llo_original>
